<compile_context>
chip_gen: v7x
topology: tpu7x:2x2x1
jax: 0.10.0
libtpu: 0.0.40
codegen_flags: <defaults>
</compile_context>

<pallas_src>
import jax
import jax.numpy as jnp
from jax.experimental import pallas as pl
from jax.experimental.pallas import tpu as pltpu


def logreg_kernel(x_ref, w_ref, b_ref, o_ref):
    # x_ref: (TB, F) VMEM; w_ref: (1, F) VMEM (lane-dense); b_ref: (1, 1) SMEM;
    # o_ref: (1, TB) VMEM (lane-dense output block).
    # NT contraction over F: (1, F) x (TB, F) -> (1, TB), f32 accumulation.
    z = jax.lax.dot_general(
        w_ref[...],
        x_ref[...],
        dimension_numbers=(((1,), (1,)), ((), ())),
        preferred_element_type=jnp.float32,
    )
    z = z + b_ref[0, 0]
    # sigmoid(z) = 1 / (1 + exp(-z)); exact reciprocal (tiny (1, TB) result, ~free).
    y = pl.reciprocal(1.0 + jnp.exp(-z), approx=False)
    o_ref[...] = y.astype(o_ref.dtype)


def _ceil_to(n, m):
    return -(-n // m) * m


def logistic_regression_forward(x, weight, bias, *, block_b=None):
    """x: (B, F); weight: (1, F) (PyTorch nn.Linear layout); bias: (1,). Returns (B, 1).

    Output dtype follows x.dtype; pass bf16 x/weight from the caller for ~2x less
    HBM traffic (do not cast f32 inputs here -- that would re-read x through HBM).
    """
    B, F = x.shape
    itemsize = jnp.dtype(x.dtype).itemsize

    # Generation-aware VMEM capacity (128 MiB v5e/v6e, 64 MiB per-TC v7x).
    vmem_cap = 64 * 1024 * 1024
    try:
        info = pltpu.get_tpu_info()
        vmem_cap = int(getattr(info, "vmem_capacity_bytes", vmem_cap))
    except Exception:
        pass

    if block_b is None:
        # ~8-12 MiB per x buffer (double-buffered by BlockSpec pipelining), capped at
        # vmem_cap // 6 so 2x tile + output + weight leaves ample headroom on v7x.
        target_tile_bytes = min(12 * 1024 * 1024,
                                max(4 * 1024 * 1024, vmem_cap // 6))
        block_b = max(128, (target_tile_bytes // (F * itemsize)) // 128 * 128)

    if B <= 128:
        TB = B                                    # single tile; block dims == full dims
    else:
        # >= 2 grid steps so both v7x TensorCores get work; TB a multiple of 128 keeps
        # the x block sublane-aligned and the (1, TB) output block lane-dense.
        TB = max(128, min(block_b, _ceil_to(-(-B // 2), 128)))
    num_steps = -(-B // TB)                       # ragged final block handled by Pallas

    w2d = weight.reshape(1, F).astype(x.dtype)    # lane-dense weight row (resident)
    b2d = bias.reshape(1, 1).astype(jnp.float32)  # SMEM scalar

    # Explicit scoped-VMEM budget: 2x double-buffered x tile + 2x (1, TB) out blocks
    # + weight + 1 MiB headroom; needed on v5e (16 MiB default) for >= 8 MiB tiles.
    vmem_needed = (2 * TB * F * itemsize + 2 * TB * itemsize + F * itemsize
                   + (1 << 20))
    vmem_limit = int(min(vmem_cap, max(vmem_needed, 16 * 1024 * 1024)))

    out = pl.pallas_call(
        logreg_kernel,
        out_shape=jax.ShapeDtypeStruct((1, B), x.dtype),
        grid=(num_steps,),
        in_specs=[
            pl.BlockSpec((TB, F), lambda i: (i, 0)),
            pl.BlockSpec((1, F), lambda i: (0, 0)),
            pl.BlockSpec(memory_space=pltpu.MemorySpace.SMEM),
        ],
        out_specs=pl.BlockSpec((1, TB), lambda i: (0, i)),
        compiler_params=pltpu.CompilerParams(
            dimension_semantics=("parallel",),
            vmem_limit_bytes=vmem_limit,
        ),
        cost_estimate=pl.CostEstimate(
            flops=2 * B * F + 4 * B,
            transcendentals=B,
            bytes_accessed=B * F * itemsize + F * itemsize + B * itemsize,
        ),
    )(x, w2d, b2d)

    # (1, B) lane-dense result -> (B, 1) column (PyTorch parity).
    return out.reshape(B, 1)


if __name__ == "__main__":
    key = jax.random.PRNGKey(0)
    kx, kw, kb = jax.random.split(key, 3)

    # Small shapes, but enough batch rows to exercise a multi-step pipelined grid.
    B, F = 512, 32
    x = jax.random.normal(kx, (B, F), dtype=jnp.float32)
    # PyTorch nn.Linear(F, 1) parameter shapes: weight (1, F), bias (1,)
    weight = jax.random.normal(kw, (1, F), dtype=jnp.float32) * 0.1
    bias = jax.random.normal(kb, (1,), dtype=jnp.float32) * 0.1

    # 4 pipelined "parallel" grid steps (block_b pinned small for the test).
    y = jax.block_until_ready(logistic_regression_forward(x, weight, bias, block_b=128))
    y_ref = jax.nn.sigmoid(x @ weight.T + bias)
    assert y.shape == (B, 1)
    assert jnp.allclose(y, y_ref, atol=2e-5, rtol=1e-5), "mismatch vs reference"

    # Ragged-batch path (no padding materialized): B=300 -> TB=256, 2 steps, masked tail.
    B2 = 300
    x2 = jax.random.normal(kx, (B2, F), dtype=jnp.float32)
    y2 = jax.block_until_ready(logistic_regression_forward(x2, weight, bias))
    y2_ref = jax.nn.sigmoid(x2 @ weight.T + bias)
    assert y2.shape == (B2, 1)
    assert jnp.allclose(y2, y2_ref, atol=2e-5, rtol=1e-5), "mismatch vs reference (ragged)"

    print("KERNEL_OK")
</pallas_src>

<mosaic_0001>
module attributes {stable_mosaic.version = 11 : i64} {
  func.func @logreg_kernel(%arg0: i32, %arg1: memref<128x32xf32, #tpu.memory_space<vmem>>, %arg2: memref<1x32xf32, #tpu.memory_space<vmem>>, %arg3: memref<1x1xf32, #tpu.memory_space<smem>>, %arg4: memref<1x128xf32, #tpu.memory_space<vmem>>) attributes {dimension_semantics = [#tpu.dimension_semantics<parallel>], iteration_bounds = array<i64: 4>, scalar_prefetch = 0 : i64, scratch_operands = 0 : i64, tpu.core_type = #tpu.core_type<tc>, window_params = [{transform_indices = @transform_0, window_bounds = array<i64: 128, 32>}, {pipeline_mode = #tpu.pipeline_mode<synchronous>, transform_indices = @transform_1, window_bounds = array<i64: 1, 32>}, {transform_indices = @transform_2, window_bounds = array<i64: 1, 1>}, {transform_indices = @transform_3, window_bounds = array<i64: 1, 128>}]} {
    %c0 = arith.constant 0 : index
    %c0_0 = arith.constant 0 : index
    %0 = vector.load %arg2[%c0, %c0_0] : memref<1x32xf32, #tpu.memory_space<vmem>>, vector<1x32xf32>
    %c0_1 = arith.constant 0 : index
    %c0_2 = arith.constant 0 : index
    %1 = vector.load %arg1[%c0_1, %c0_2] : memref<128x32xf32, #tpu.memory_space<vmem>>, vector<128x32xf32>
    %cst = arith.constant dense<0.000000e+00> : vector<1x128xf32>
    %2 = tpu.matmul %0, %1, %cst {dimension_numbers = #tpu.dot_dimension_numbers<[1], [1], [0], [0], [0, 0, 1, 0], [], []>} : vector<1x32xf32>, vector<128x32xf32>, vector<1x128xf32> -> vector<1x128xf32>
    %c0_3 = arith.constant 0 : index
    %c0_4 = arith.constant 0 : index
    %3 = memref.load %arg3[%c0_3, %c0_4] : memref<1x1xf32, #tpu.memory_space<smem>>
    %4 = vector.broadcast %3 : f32 to vector<1x128xf32>
    %5 = arith.addf %2, %4 : vector<1x128xf32>
    %cst_5 = arith.constant 0.000000e+00 : f32
    %6 = vector.broadcast %cst_5 : f32 to vector<1x128xf32>
    %7 = arith.subf %6, %5 : vector<1x128xf32>
    %8 = math.exp %7 : vector<1x128xf32>
    %cst_6 = arith.constant 1.000000e+00 : f32
    %9 = vector.broadcast %cst_6 : f32 to vector<1x128xf32>
    %10 = arith.addf %9, %8 : vector<1x128xf32>
    %11 = tpu.reciprocal %10 : vector<1x128xf32> -> vector<1x128xf32>
    %c0_7 = arith.constant 0 : index
    %c0_8 = arith.constant 0 : index
    %12 = vector.load %arg4[%c0_7, %c0_8] : memref<1x128xf32, #tpu.memory_space<vmem>>, vector<1x128xf32>
    tpu.vector_store %arg4[%c0_7, %c0_8], %11 {strides = array<i32>} : memref<1x128xf32, #tpu.memory_space<vmem>>, vector<1x128xf32>,
    return
  }
  func.func @transform_0(%arg0: i32) -> (i32, i32) {
    %c0_i32 = arith.constant 0 : i32
    %c0_i32_0 = arith.constant 0 : i32
    return %arg0, %c0_i32 : i32, i32
  }
  func.func @transform_1(%arg0: i32) -> (i32, i32) {
    %c0_i32 = arith.constant 0 : i32
    %c0_i32_0 = arith.constant 0 : i32
    %c0_i32_1 = arith.constant 0 : i32
    return %c0_i32, %c0_i32_0 : i32, i32
  }
  func.func @transform_2(%arg0: i32) -> (i32, i32) {
    %c0_i32 = arith.constant 0 : i32
    %c0_i32_0 = arith.constant 0 : i32
    %c0_i32_1 = arith.constant 0 : i32
    return %c0_i32, %c0_i32_0 : i32, i32
  }
  func.func @transform_3(%arg0: i32) -> (i32, i32) {
    %c0_i32 = arith.constant 0 : i32
    %c0_i32_0 = arith.constant 0 : i32
    return %c0_i32, %arg0 : i32, i32
  }
}

</mosaic_0001>

<llo_original>
// kernel: tpu_custom_call.1
$region0: #{tpu_custom_call.1}
  #allocation0 [shape = 'u32[]', space=smem, size = 0x4, offset = 0x4, fixed_abs, tag = 'smem constant byte address 0x4 - core index']
  #allocation1 [shape = 'u32[144,128]{1,0:T(1,128)}', space=vmem, size = 0x12000, scoped, tag = 'internal scratch']
  #allocation2 [shape = 'f32[1,1]{1,0:T(1,128)S(6)}', space=smem, size = 0x200, scoped, tag = 'scoped memory for tpu_custom_call.1']
  %s0 = inlined_call_operand.vmem [shape: f32[512,32], index: 0, kind: input, shape index: {}]
  %s1 = inlined_call_operand.vmem [shape: f32[1,32], index: 1, kind: input, shape index: {}]
  %s2 = inlined_call_operand.<no memory space> [shape: f32[1,1], index: 2, kind: input, shape index: {}]
  %s3 = inlined_call_operand.hbm [shape: f32[1,512], index: 3, kind: output, shape index: {}]
  %s4 = sld [smem:[#allocation0]]
  $region45: #{tpu_custom_call.1} parent=0
    _
  %s6 = ssub.s32 1, %s4
  %s7 = scalar_select 0, %s6, %s4
  %8 = sst [smem:[#allocation2]] %s2
  $region1: #{tpu_custom_call.1} parent=0
    #allocation3 [shape = 'u8[1024]{0}', space=vmem, size = 0x400, scoped, tag = 'output window, operand 0']
    #allocation4 [shape = 's32[2]{0}', space=sflag, size = 0x8, scoped, tag = 'scoped memory for tpu_custom_call.1']
    %9 = vsyncpa [#allocation4], 0
    %s10 = scalar_lea.sflag [#allocation4], 1
    %11 = vsyncpa %s10, 0
    loop: start=0, step=1, limit=6
    $region2: #{tpu_custom_call.1} parent=1 // loop_pre_header
      _
    $region3: #{tpu_custom_call.1} parent=1 // loop_header
      %s13 = sphi 0, %s17
      %p14 = scmp.ge.s32.totalorder %s13, 6
      %s23 = sphi 0, %s25
      %s26 = sphi 0, %s23
      %s27 = sphi 0, %s26
      %s43 = sphi 0, %s27
      %s47 = sphi 0, %s47
      %s49 = sphi 0, %s47
      %s50 = sphi 0, %s49
      %s64 = sphi 0, %s50
      %s68 = sphi 0, %s68
      %s70 = sphi 0, %s68
      %s71 = sphi 0, %s70
      %s85 = sphi 0, %s71
      %s91 = sphi 0, %s93
      %s94 = sphi 0, %s91
      %s95 = sphi 0, %s94
      %s111 = sphi 0, %s95
    $region4: #{tpu_custom_call.1} parent=1 // loop_header_branch
      %16 = sbr.rel (%p14) target = $region8
    $region5: #{tpu_custom_call.1} parent=1 // loop_body
      %s18 = ssub.s32 %s13, 1
      %s19 = ssub.s32 %s13, 2
      %s20 = sadd.s32 %s13, 1
      %s21 = ssub.s32 %s13, %s20
      %p22 = scmp.eq.s32.totalorder %s21, 0
      %s24 = sadd.s32 %s23, 1
      %s25 = scalar_select %p22, %s23, %s24
      %p28 = pneg %p22
      %p29 = scmp.eq.s32.totalorder %s13, 3
      %p30 = por %p28, %p29
      %p31 = scmp.ne.s32.totalorder %s23, %s26
      %p32 = scmp.eq.s32.totalorder %s13, 0
      %p33 = por %p31, %p32
      %p34 = scmp.ne.s32.totalorder %s23, %s26
      %p35 = scmp.eq.s32.totalorder %s18, 3
      %p36 = por %p34, %p35
      %p37 = scmp.ne.s32.totalorder %s26, %s27
      %p38 = scmp.eq.s32.totalorder %s18, 0
      %p39 = por %p37, %p38
      %p40 = scmp.ne.s32.totalorder %s26, %s27
      %p41 = scmp.eq.s32.totalorder %s19, 3
      %p42 = por %p40, %p41
      %p44 = scmp.ne.s32.totalorder %s27, %s43
      %p45 = scmp.eq.s32.totalorder %s19, 0
      %p46 = por %p44, %p45
      %s48 = sadd.s32 %s47, 1
      %p51 = scmp.eq.s32.totalorder %s13, 3
      %p52 = scmp.ne.s32.totalorder %s47, %s49
      %p53 = scmp.eq.s32.totalorder %s13, 0
      %p54 = por %p52, %p53
      %p55 = scmp.ne.s32.totalorder %s47, %s49
      %p56 = scmp.eq.s32.totalorder %s18, 3
      %p57 = por %p55, %p56
      %p58 = scmp.ne.s32.totalorder %s49, %s50
      %p59 = scmp.eq.s32.totalorder %s18, 0
      %p60 = por %p58, %p59
      %p61 = scmp.ne.s32.totalorder %s49, %s50
      %p62 = scmp.eq.s32.totalorder %s19, 3
      %p63 = por %p61, %p62
      %p65 = scmp.ne.s32.totalorder %s50, %s64
      %p66 = scmp.eq.s32.totalorder %s19, 0
      %p67 = por %p65, %p66
      %s69 = sadd.s32 %s68, 1
      %p72 = scmp.eq.s32.totalorder %s13, 3
      %p73 = scmp.ne.s32.totalorder %s68, %s70
      %p74 = scmp.eq.s32.totalorder %s13, 0
      %p75 = por %p73, %p74
      %p76 = scmp.ne.s32.totalorder %s68, %s70
      %p77 = scmp.eq.s32.totalorder %s18, 3
      %p78 = por %p76, %p77
      %p79 = scmp.ne.s32.totalorder %s70, %s71
      %p80 = scmp.eq.s32.totalorder %s18, 0
      %p81 = por %p79, %p80
      %p82 = scmp.ne.s32.totalorder %s70, %s71
      %p83 = scmp.eq.s32.totalorder %s19, 3
      %p84 = por %p82, %p83
      %p86 = scmp.ne.s32.totalorder %s71, %s85
      %p87 = scmp.eq.s32.totalorder %s19, 0
      %p88 = por %p86, %p87
      %s89 = ssub.s32 %s13, %s20
      %p90 = scmp.eq.s32.totalorder %s89, 0
      %s92 = sadd.s32 %s91, 1
      %s93 = scalar_select %p90, %s91, %s92
      %p96 = pneg %p90
      %p97 = scmp.eq.s32.totalorder %s13, 3
      %p98 = por %p96, %p97
      %p99 = scmp.ne.s32.totalorder %s91, %s94
      %p100 = scmp.eq.s32.totalorder %s13, 0
      %p101 = por %p99, %p100
      %p102 = scmp.ne.s32.totalorder %s91, %s94
      %p103 = scmp.eq.s32.totalorder %s18, 3
      %p104 = por %p102, %p103
      %p105 = scmp.ne.s32.totalorder %s94, %s95
      %p106 = scmp.eq.s32.totalorder %s18, 0
      %p107 = por %p105, %p106
      %p108 = scmp.ne.s32.totalorder %s94, %s95
      %p109 = scmp.eq.s32.totalorder %s19, 3
      %p110 = por %p108, %p109
      %p112 = scmp.ne.s32.totalorder %s95, %s111
      %p113 = scmp.eq.s32.totalorder %s19, 0
      %p114 = por %p112, %p113
      %p115 = scmp.le.s32.totalorder 1, %s13
      %p116 = scmp.lt.s32.totalorder %s13, 5
      %p117 = pnand %p115, %p116
      %p118 = pneg %p117
      // Predicated region
      $region9: #{tpu_custom_call.1} parent=5 // pred_check
        _
      $region10: #{tpu_custom_call.1} parent=5 // pred_check_branch
        %120 = sbr.rel (%p117) target = $region12
      $region11: #{tpu_custom_call.1} parent=5 // pred_region
        %s121 = ssub.s32 %s13, 1
        // Predicated region
        $region13: #{tpu_custom_call.1} parent=11 // pred_check
          %p122 = pneg %p60
        $region14: #{tpu_custom_call.1} parent=11 // pred_check_branch
          %124 = sbr.rel (%p122) target = $region16
        $region15: #{tpu_custom_call.1} parent=11 // pred_region
          _
        $region16: #{tpu_custom_call.1} parent=11 // pred_fallthru
          _
        // Predicated region
        $region17: #{tpu_custom_call.1} parent=11 // pred_check
          %p125 = pneg %p81
        $region18: #{tpu_custom_call.1} parent=11 // pred_check_branch
          %127 = sbr.rel (%p125) target = $region20
        $region19: #{tpu_custom_call.1} parent=11 // pred_region
          _
        $region20: #{tpu_custom_call.1} parent=11 // pred_fallthru
          _
      $region12: #{tpu_custom_call.1} parent=5 // pred_fallthru
        _
      %p128 = scmp.lt.s32.totalorder %s13, 4
      // Predicated region
      $region21: #{tpu_custom_call.1} parent=5 // pred_check
        %p129 = pneg %p128
      $region22: #{tpu_custom_call.1} parent=5 // pred_check_branch
        %131 = sbr.rel (%p129) target = $region24
      $region23: #{tpu_custom_call.1} parent=5 // pred_region
        // Predicated region
        $region25: #{tpu_custom_call.1} parent=23 // pred_check
          %p132 = pneg %p33
        $region26: #{tpu_custom_call.1} parent=23 // pred_check_branch
          %134 = sbr.rel (%p132) target = $region28
        $region27: #{tpu_custom_call.1} parent=23 // pred_region
          %s135 = smul.u32 16, %s13
          %p136 = scmp.lt.s32.totalorder %s135, 63
          %s137 = scalar_select %p136, %s135, 63
          %s138 = smul.addr %s137, 8
          %s139 = scalar_lea.vmem %s0, %s138
          %s140 = smul.u32 16, %s13
        $region28: #{tpu_custom_call.1} parent=23 // pred_fallthru
          _
      $region24: #{tpu_custom_call.1} parent=5 // pred_fallthru
        _
      %p141 = scmp.le.s32.totalorder 1, %s13
      %p142 = scmp.lt.s32.totalorder %s13, 5
      %p143 = pnand %p141, %p142
      %p144 = pneg %p143
      // Predicated region
      $region29: #{tpu_custom_call.1} parent=5 // pred_check
        _
      $region30: #{tpu_custom_call.1} parent=5 // pred_check_branch
        %146 = sbr.rel (%p143) target = $region32
      $region31: #{tpu_custom_call.1} parent=5 // pred_region
        %s147 = ssub.s32 %s13, 1
        %s148 = smul.u32 16, %s18
        %p149 = scmp.lt.s32.totalorder %s148, 63
        %s150 = scalar_select %p149, %s148, 63
        %s151 = smul.addr %s150, 8
        %s152 = scalar_lea.vmem %s0, %s151
        %p153 = pneg %p39
        %p154 = pneg %p36
        %p155 = pneg %p60
        %p156 = pneg %p57
        %p157 = pneg %p81
        %p158 = pneg %p78
        %p159 = pneg %p107
        %p160 = pneg %p104
        %s161 = sand.u32 %s94, 1
        %s162 = scalar_lea.sflag [#allocation4], %s161
        %s163 = sand.u32 %s94, 1
        %s164 = scalar_lea.vmem [#allocation3], %s163
        %s165 = smul.u32 16, %s18
        %p166 = scmp.lt.s32.totalorder %s165, 63
        %s167 = scalar_select %p166, %s165, 63
        %s168 = smul.addr %s167, 8
        %s169 = scalar_lea.vmem %s0, %s168
        %s170 = smul.u32 16, %s18
        %v171 = vld [vmem:[%s1] sm:$0x1]
        %v172 = vld [vmem:[%s169] sm:$0xff]
        %v173 = vld [vmem:[%s169 + $0x8] sm:$0xff]
        %v174 = vld [vmem:[%s169 + $0x10] sm:$0xff]
        %v175 = vld [vmem:[%s169 + $0x18] sm:$0xff]
        %v176 = vld [vmem:[%s169 + $0x20] sm:$0xff]
        %v177 = vld [vmem:[%s169 + $0x28] sm:$0xff]
        %v178 = vld [vmem:[%s169 + $0x30] sm:$0xff]
        %v179 = vld [vmem:[%s169 + $0x38] sm:$0xff]
        %v180 = vld [vmem:[%s169 + $0x40] sm:$0xff]
        %v181 = vld [vmem:[%s169 + $0x48] sm:$0xff]
        %v182 = vld [vmem:[%s169 + $0x50] sm:$0xff]
        %v183 = vld [vmem:[%s169 + $0x58] sm:$0xff]
        %v184 = vld [vmem:[%s169 + $0x60] sm:$0xff]
        %v185 = vld [vmem:[%s169 + $0x68] sm:$0xff]
        %v186 = vld [vmem:[%s169 + $0x70] sm:$0xff]
        %v187 = vld [vmem:[%s169 + $0x78] sm:$0xff]
        %s188 = sld [smem:[#allocation2]]
        %v189 = vstv %s188
        %vm190 = vcmask 261120
        %v192 = vsel %vm190, %v171, 0
        %v195 = vsel %vm190, %v172, 0
        %v198 = vsel %vm190, %v173, 0
        %v201 = vsel %vm190, %v174, 0
        %v204 = vsel %vm190, %v175, 0
        %v207 = vsel %vm190, %v176, 0
        %v210 = vsel %vm190, %v177, 0
        %v213 = vsel %vm190, %v178, 0
        %v216 = vsel %vm190, %v179, 0
        %v219 = vsel %vm190, %v180, 0
        %v222 = vsel %vm190, %v181, 0
        %v225 = vsel %vm190, %v182, 0
        %v228 = vsel %vm190, %v183, 0
        %v231 = vsel %vm190, %v184, 0
        %v234 = vsel %vm190, %v185, 0
        %v237 = vsel %vm190, %v186, 0
        %v240 = vsel %vm190, %v187, 0
        %242 = vmatprep.subr.mxu0 0.0
        %243 = vmatpush1.xpose.msra.mxu0 %v195
        %244 = vmatprep.subr.mxu0 0.0
        %245 = vmatpush1.xpose.msra.mxu0 %v198
        %246 = vmatprep.subr.mxu0 0.0
        %247 = vmatpush1.xpose.msra.mxu0 %v201
        %248 = vmatprep.subr.mxu0 0.0
        %249 = vmatpush1.xpose.msra.mxu0 %v204
        %250 = vmatprep.subr.mxu0 0.0
        %251 = vmatpush1.xpose.msra.mxu0 %v207
        %252 = vmatprep.subr.mxu0 0.0
        %253 = vmatpush1.xpose.msra.mxu0 %v210
        %254 = vmatprep.subr.mxu0 0.0
        %255 = vmatpush1.xpose.msra.mxu0 %v213
        %256 = vmatprep.subr.mxu0 0.0
        %257 = vmatpush1.xpose.msra.mxu0 %v216
        %258 = vmatprep.subr.mxu0 0.0
        %259 = vmatpush1.xpose.msra.mxu0 %v219
        %260 = vmatprep.subr.mxu0 0.0
        %261 = vmatpush1.xpose.msra.mxu0 %v222
        %262 = vmatprep.subr.mxu0 0.0
        %263 = vmatpush1.xpose.msra.mxu0 %v225
        %264 = vmatprep.subr.mxu0 0.0
        %265 = vmatpush1.xpose.msra.mxu0 %v228
        %266 = vmatprep.subr.mxu0 0.0
        %267 = vmatpush1.xpose.msra.mxu0 %v231
        %268 = vmatprep.subr.mxu0 0.0
        %269 = vmatpush1.xpose.msra.mxu0 %v234
        %270 = vmatprep.subr.mxu0 0.0
        %271 = vmatpush1.xpose.msra.mxu0 %v237
        %272 = vmatprep.subr.mxu0 0.0
        %273 = vmatpush1.xpose.msra.mxu0 %v240
        %274 = vmatprep.subr.mxu0 0.0
        %275 = vmatpush1.xpose.msra.mxu0 0.0
        %276 = vmatprep.subr.mxu0 0.0
        %277 = vmatpush1.xpose.msra.mxu0 0.0
        %278 = vmatprep.subr.mxu0 0.0
        %279 = vmatpush1.xpose.msra.mxu0 0.0
        %280 = vmatprep.subr.mxu0 0.0
        %281 = vmatpush1.xpose.msra.mxu0 0.0
        %282 = vmatprep.subr.mxu0 0.0
        %283 = vmatpush1.xpose.msra.mxu0 0.0
        %284 = vmatprep.subr.mxu0 0.0
        %285 = vmatpush1.xpose.msra.mxu0 0.0
        %286 = vmatprep.subr.mxu0 0.0
        %287 = vmatpush1.xpose.msra.mxu0 0.0
        %288 = vmatprep.subr.mxu0 0.0
        %289 = vmatpush1.xpose.msra.mxu0 0.0
        %290 = vmatprep.subr.mxu0 0.0
        %291 = vmatpush1.xpose.msra.mxu0 0.0
        %292 = vmatprep.subr.mxu0 0.0
        %293 = vmatpush1.xpose.msra.mxu0 0.0
        %294 = vmatprep.subr.mxu0 0.0
        %295 = vmatpush1.xpose.msra.mxu0 0.0
        %296 = vmatprep.subr.mxu0 0.0
        %297 = vmatpush1.xpose.msra.mxu0 0.0
        %298 = vmatprep.subr.mxu0 0.0
        %299 = vmatpush1.xpose.msra.mxu0 0.0
        %300 = vmatprep.subr.mxu0 0.0
        %301 = vmatpush1.xpose.msra.mxu0 0.0
        %302 = vmatprep.subr.mxu0 0.0
        %303 = vmatpush1.xpose.msra.mxu0 0.0
        %304 = vmatprep.subr.mxu0 0.0
        %305 = vmatpush1.xpose.msra.mxu0 0.0
        %306 = vmatprep.mubr.f32.mxu0 0.0
        %307 = vmatmul.mubr.f32.gmra.mrb[0].mxu0 %v192
        %v308 = vpop.f32.mrb[0].mxu0
        %v309 = vadd.f32 %v189, %v308
        %v310 = vpop.f32.mrb[0].mxu0
        %311 = vdwg.mxu0
        %v312 = vsub.f32 0.0, %v309
        %v313 = vmul.f32 %v312, 1.442695
        %v314 = vpow.pop %v313
        %v315 = vadd.f32 %v314, 1.0
        %v316 = vrcp.pop %v315
        %317 = vst [vmem:[%s164] sm:$0x1] %v316
        %s318 = sand.u32 %s94, 1
        %s319 = scalar_lea.sflag [#allocation4], %s318
        %s320 = sand.u32 %s94, 1
        %s321 = scalar_lea.vmem [#allocation3], %s320
        // Predicated region
        $region33: #{tpu_custom_call.1} parent=31 // pred_check
          %p322 = pneg %p104
        $region34: #{tpu_custom_call.1} parent=31 // pred_check_branch
          %324 = sbr.rel (%p322) target = $region36
        $region35: #{tpu_custom_call.1} parent=31 // pred_region
          %s326 = ssub.s32 16, 16
          %327 = vsyncadd %s319, %s326
          %s328 = smul.addr %s18, 16
          %s329 = scalar_lea.hbm %s3, %s328
          %s331 = sshll.u32 %s321, 4
          %s332 = int_to_ptr.vmem [resolvable:$true] %s331
          %334 = dma.vmem_to_hbm [thread:$0]  %s332, 16, %s329, %s319
        $region36: #{tpu_custom_call.1} parent=31 // pred_fallthru
          _
      $region32: #{tpu_custom_call.1} parent=5 // pred_fallthru
        _
      %p335 = scmp.le.s32.totalorder 2, %s13
      // Predicated region
      $region37: #{tpu_custom_call.1} parent=5 // pred_check
        %p336 = pneg %p335
      $region38: #{tpu_custom_call.1} parent=5 // pred_check_branch
        %338 = sbr.rel (%p336) target = $region40
      $region39: #{tpu_custom_call.1} parent=5 // pred_region
        %s339 = ssub.s32 %s13, 2
        // Predicated region
        $region41: #{tpu_custom_call.1} parent=39 // pred_check
          %p340 = pneg %p110
        $region42: #{tpu_custom_call.1} parent=39 // pred_check_branch
          %342 = sbr.rel (%p340) target = $region44
        $region43: #{tpu_custom_call.1} parent=39 // pred_region
          %s343 = sand.u32 %s95, 1
          %s344 = scalar_lea.sflag [#allocation4], %s343
          %s345 = sand.u32 %s95, 1
          %s346 = scalar_lea.vmem [#allocation3], %s345
          %347 = dma.done %s344, 16
        $region44: #{tpu_custom_call.1} parent=39 // pred_fallthru
          _
      $region40: #{tpu_custom_call.1} parent=5 // pred_fallthru
        _
    $region6: #{tpu_custom_call.1} parent=1 // loop_footer
      %s17 = sadd.s32 1, %s13
    $region7: #{tpu_custom_call.1} parent=1 // loop_footer_branch
      %12 = sbr.rel target = $region3
    $region8: #{tpu_custom_call.1} parent=1 // loop_exit
      _
    %348 = vsyncpa [#allocation4], 1
    %s349 = scalar_lea.sflag [#allocation4], 1
    %350 = vsyncpa %s349, 1

</llo_original>
